<compile_context>
chip_gen: v7x
topology: tpu7x:2x2x1
jax: 0.10.0
libtpu: 0.0.40
codegen_flags: <defaults>
</compile_context>

<pallas_src>
import math
from functools import partial

import jax
import jax.numpy as jnp
from jax import lax
from jax.experimental import pallas as pl
from jax.experimental.pallas import tpu as pltpu

# ----------------------------- config (scaled-down VGG) ----------------------
CFG = [(3, 8), (8, 16)]                   # (Cin, Cout) per 3x3 conv block, 2x2 maxpool after
FEAT_HW = 16 // (2 ** len(CFG))           # 16 -> 8 -> 4
FC1_IN = CFG[-1][1] * FEAT_HW * FEAT_HW   # 16*4*4 = 256   (stands in for 512*7*7)
FC1_OUT = 128                             # stands in for 4096
FC2_OUT = 128                             # stands in for 4096
NUM_CLASSES = 64                          # stands in for 1000

# tile targets (clamped to the padded problem dims)
_TM_TARGET, _TN_TARGET, _TK_TARGET = 256, 512, 2048
_VMEM_LIMIT = 48 * 1024 * 1024            # < 64 MiB physical VMEM on v7x


def _round_up(x, m):
    return ((x + m - 1) // m) * m


def _pick_tile(dim, target, unit):
    """Largest tile <= target that is a multiple of `unit` and divides `dim`.

    `dim` must already be a multiple of `unit`.
    """
    t = min(dim, (max(target, unit) // unit) * unit)
    while dim % t:
        t -= unit
    return t


# ----------------------------- fused linear kernel ---------------------------
def _linear_kernel(*refs, relu, has_noise, multi_k):
    # refs = (x_ref, w_ref, b_ref, [noise_ref], o_ref)
    x_ref, w_ref, b_ref = refs[0], refs[1], refs[2]
    n_ref = refs[3] if has_noise else None
    o_ref = refs[-1]

    # bf16 x bf16 matmul with f32 accumulation on the MXU.
    part = jnp.dot(x_ref[...].astype(jnp.bfloat16), w_ref[...],
                   preferred_element_type=jnp.float32)

    def epilogue(y):
        if relu:
            y = jnp.maximum(y, 0.0)
        if has_noise:
            # rand_gauss_dropout: multiply by noise = eps*std + mu (std=mu=1),
            # applied AFTER relu (matches the PyTorch op order), in f32.
            y = y * n_ref[...]
        return y

    if multi_k:
        k = pl.program_id(2)

        @pl.when(k == 0)
        def _():
            o_ref[...] = part + b_ref[...]       # fold bias into first partial write

        @pl.when(k > 0)
        def _():
            o_ref[...] += part                   # accumulate in the resident f32 out block

        @pl.when(k == pl.num_programs(2) - 1)
        def _():
            o_ref[...] = epilogue(o_ref[...])
    else:
        o_ref[...] = epilogue(part + b_ref[...])  # single K step: no revisiting needed


def pallas_linear(xp, w, b, *, relu=False, noise=None):
    """y = relu?(xp @ W + b) [* gaussian noise], fused in one Pallas kernel.

    xp    : (Mp, Kp) f32 activation, pre-padded (Mp % 8 == 0, Kp % 128 == 0)
    w     : (Kp, Np) bf16 weight, pre-transposed + pre-padded at init time
    b     : (1, Np)  f32 bias, pre-padded
    noise : optional (Mp, Np) f32 multiplicative N(1,1) dropout noise
    Returns the full padded (Mp, Np) f32 output (caller slices once at the end).
    """
    Mp, Kp = xp.shape
    Kw, Np = w.shape
    assert Kw == Kp and Mp % 8 == 0 and Kp % 128 == 0 and Np % 128 == 0
    assert b.shape == (1, Np)
    if noise is not None:
        assert noise.shape == (Mp, Np) and noise.dtype == jnp.float32

    tm = _pick_tile(Mp, _TM_TARGET, 8)
    tk = _pick_tile(Kp, _TK_TARGET, 128)
    tn = _pick_tile(Np, _TN_TARGET, 128)
    # v7x shards "parallel" grid axes over 2 TensorCores: keep >= 2 parallel
    # tiles when the batch axis collapses to a single tile.
    if Mp // tm == 1 and Np // tn < 2 and Np >= 256:
        tn = _pick_tile(Np, max(128, Np // 2), 128)
    nk = Kp // tk
    multi_k = nk > 1

    # double-buffered per-step footprint (f32 x, bf16 w, f32 bias/noise/out)
    footprint = 2 * (tm * tk * 4 + tk * tn * 2 + tn * 4 + tm * tn * 4) + tm * tn * 4
    assert footprint < _VMEM_LIMIT

    has_noise = noise is not None

    if multi_k:
        grid = (Mp // tm, Np // tn, nk)
        x_spec = pl.BlockSpec((tm, tk), lambda i, j, k: (i, k))
        w_spec = pl.BlockSpec((tk, tn), lambda i, j, k: (k, j))
        b_spec = pl.BlockSpec((1, tn), lambda i, j, k: (0, j))
        mn_spec = pl.BlockSpec((tm, tn), lambda i, j, k: (i, j))
        dims = ("parallel", "parallel", "arbitrary")
    else:
        grid = (Mp // tm, Np // tn)
        x_spec = pl.BlockSpec((tm, tk), lambda i, j: (i, 0))
        w_spec = pl.BlockSpec((tk, tn), lambda i, j: (0, j))
        b_spec = pl.BlockSpec((1, tn), lambda i, j: (0, j))
        mn_spec = pl.BlockSpec((tm, tn), lambda i, j: (i, j))
        dims = ("parallel", "parallel")

    in_specs = [x_spec, w_spec, b_spec]
    operands = [xp, w, b]
    if has_noise:
        in_specs.append(mn_spec)
        operands.append(noise)

    kernel = partial(_linear_kernel, relu=relu, has_noise=has_noise,
                     multi_k=multi_k)

    return pl.pallas_call(
        kernel,
        out_shape=jax.ShapeDtypeStruct((Mp, Np), jnp.float32),
        grid=grid,
        in_specs=in_specs,
        out_specs=mn_spec,
        compiler_params=pltpu.CompilerParams(
            dimension_semantics=dims,
            vmem_limit_bytes=_VMEM_LIMIT),
    )(*operands)


# ----------------------------- feature backbone (injected `features` module) -
def conv3x3_relu(x_nhwc, w_oihw, b):
    # 3x3, stride 1, pad 1 conv + bias + relu (XLA conv: no 9x im2col blow-up)
    w_hwio = jnp.transpose(w_oihw, (2, 3, 1, 0))
    y = lax.conv_general_dilated(
        x_nhwc, w_hwio, window_strides=(1, 1), padding=((1, 1), (1, 1)),
        dimension_numbers=("NHWC", "HWIO", "NHWC"))
    return jnp.maximum(y + b, 0.0)


def maxpool2x2(x_nhwc):
    return lax.reduce_window(x_nhwc, -jnp.inf, lax.max,
                             window_dimensions=(1, 2, 2, 1),
                             window_strides=(1, 2, 2, 1),
                             padding="VALID")


# ----------------------------- parameter init (matches _initialize_weights) --
def init_params(key):
    keys = jax.random.split(key, len(CFG) + 3)
    convs = []
    for idx, (cin, cout) in enumerate(CFG):
        n = 3 * 3 * cout
        w = jax.random.normal(keys[idx], (cout, cin, 3, 3), jnp.float32) * math.sqrt(2.0 / n)
        convs.append((w, jnp.zeros((cout,), jnp.float32)))

    def linear(k, din, dout):
        # torch layout [out, in], N(0, 0.01) weights, zero bias; transposed,
        # zero-padded to 128 multiples and cast to bf16 ONCE here.
        w = jax.random.normal(k, (dout, din), jnp.float32) * 0.01
        kp, np_ = _round_up(din, 128), _round_up(dout, 128)
        wp = jnp.zeros((kp, np_), jnp.float32).at[:din, :dout].set(jnp.transpose(w))
        return {"w": wp.astype(jnp.bfloat16), "b": jnp.zeros((1, np_), jnp.float32)}

    return {
        "convs": convs,
        "fc1": linear(keys[-3], FC1_IN, FC1_OUT),
        "fc2": linear(keys[-2], FC1_OUT, FC2_OUT),
        "fc3": linear(keys[-1], FC2_OUT, NUM_CLASSES),
    }


# ----------------------------- full forward ----------------------------------
def vgg_forward(params, x_nchw, train, key):
    # features: conv3x3 + relu + 2x2 maxpool per block
    x = jnp.transpose(x_nchw, (0, 2, 3, 1))                 # NCHW -> NHWC
    for (w, b) in params["convs"]:
        x = maxpool2x2(conv3x3_relu(x, w, b))

    # x.view(N, -1): flatten in NCHW order like PyTorch
    x = jnp.transpose(x, (0, 3, 1, 2)).reshape(x.shape[0], -1)
    B, K = x.shape

    fc1, fc2, fc3 = params["fc1"], params["fc2"], params["fc3"]
    Mp, Kp = _round_up(B, 8), fc1["w"].shape[0]
    # Pad the activation ONCE; padded rows/cols ride through the classifier
    # (rows are independent in a GEMM, padded K rows of W are zero) and are
    # sliced off once at the end -> no per-layer pad/slice HBM copies.
    x = jnp.pad(x, ((0, Mp - B), (0, Kp - K)))

    k1, k2 = jax.random.split(key)

    def gauss_noise(k, n_cols):
        # rand_gauss_dropout noise = eps*std + mu with std = mu = 1.0 (train only)
        # TODO(synk): draw in-kernel via pltpu.prng_seed/stateful_normal on real
        # TPU to skip this HBM tensor; no CPU/interpret lowering exists for it.
        return (1.0 + jax.random.normal(k, (Mp, n_cols), jnp.float32)) if train else None

    # TODO(synk): at tiny batch, fuse fc1->fc2->fc3 into one pallas_call that
    # keeps the (Mp, Np) activation resident in VMEM and streams only weights.
    x = pallas_linear(x, fc1["w"], fc1["b"], relu=True,
                      noise=gauss_noise(k1, fc1["w"].shape[1]))
    x = pallas_linear(x, fc2["w"], fc2["b"], relu=True,
                      noise=gauss_noise(k2, fc2["w"].shape[1]))
    x = pallas_linear(x, fc3["w"], fc3["b"], relu=False)
    return x[:B, :NUM_CLASSES]


if __name__ == "__main__":
    key = jax.random.PRNGKey(0)
    pkey, xkey, nkey = jax.random.split(key, 3)

    params = init_params(pkey)
    x = jax.random.normal(xkey, (2, 3, 16, 16), jnp.float32)   # NCHW like PyTorch

    out_train = jax.block_until_ready(vgg_forward(params, x, train=True, key=nkey))
    out_eval = jax.block_until_ready(vgg_forward(params, x, train=False, key=nkey))

    assert out_train.shape == (2, NUM_CLASSES)
    assert out_eval.shape == (2, NUM_CLASSES)
    assert jnp.all(jnp.isfinite(out_train)) and jnp.all(jnp.isfinite(out_eval))

    # Exercise the multi-K (nk > 1) accumulate-into-output path plus the
    # relu + noise epilogue, and check against the XLA bf16/f32-acc reference.
    tk1, tk2, tk3, tk4 = jax.random.split(jax.random.PRNGKey(1), 4)
    M, K, N = 64, 4096, 384
    xt = jax.random.normal(tk1, (M, K), jnp.float32)
    wt = (jax.random.normal(tk2, (K, N), jnp.float32) / math.sqrt(K)).astype(jnp.bfloat16)
    bt = jax.random.normal(tk3, (1, N), jnp.float32)
    nt = 1.0 + jax.random.normal(tk4, (M, N), jnp.float32)

    yt = jax.block_until_ready(pallas_linear(xt, wt, bt, relu=True, noise=nt))
    ref = jnp.dot(xt.astype(jnp.bfloat16), wt, preferred_element_type=jnp.float32) + bt
    ref = jnp.maximum(ref, 0.0) * nt
    assert yt.shape == (M, N)
    assert float(jnp.max(jnp.abs(yt - ref))) < 1e-2

    print("KERNEL_OK")
</pallas_src>

<mosaic_0001>
module attributes {stable_mosaic.version = 11 : i64} {
  func.func @_linear_kernel(%arg0: i32, %arg1: i32, %arg2: memref<8x256xf32, #tpu.memory_space<vmem>>, %arg3: memref<256x128xbf16, #tpu.memory_space<vmem>>, %arg4: memref<1x128xf32, #tpu.memory_space<vmem>>, %arg5: memref<8x128xf32, #tpu.memory_space<vmem>>, %arg6: memref<8x128xf32, #tpu.memory_space<vmem>>) attributes {dimension_semantics = [#tpu.dimension_semantics<parallel>, #tpu.dimension_semantics<parallel>], iteration_bounds = array<i64: 1, 1>, scalar_prefetch = 0 : i64, scratch_operands = 0 : i64, tpu.core_type = #tpu.core_type<tc>, window_params = [{transform_indices = @transform_0, window_bounds = array<i64: 8, 256>}, {transform_indices = @transform_1, window_bounds = array<i64: 256, 128>}, {transform_indices = @transform_2, window_bounds = array<i64: 1, 128>}, {transform_indices = @transform_3, window_bounds = array<i64: 8, 128>}, {transform_indices = @transform_4, window_bounds = array<i64: 8, 128>}]} {
    %c0 = arith.constant 0 : index
    %c0_0 = arith.constant 0 : index
    %0 = vector.load %arg2[%c0, %c0_0] : memref<8x256xf32, #tpu.memory_space<vmem>>, vector<8x256xf32>
    %1 = arith.truncf %0 : vector<8x256xf32> to vector<8x256xbf16>
    %c0_1 = arith.constant 0 : index
    %c0_2 = arith.constant 0 : index
    %2 = vector.load %arg3[%c0_1, %c0_2] : memref<256x128xbf16, #tpu.memory_space<vmem>>, vector<256x128xbf16>
    %cst = arith.constant dense<0.000000e+00> : vector<8x128xf32>
    %3 = tpu.matmul %1, %2, %cst {dimension_numbers = #tpu.dot_dimension_numbers<[1], [0], [0], [1], [0, 0, 1, 1], [], []>} : vector<8x256xbf16>, vector<256x128xbf16>, vector<8x128xf32> -> vector<8x128xf32>
    %c0_3 = arith.constant 0 : index
    %c0_4 = arith.constant 0 : index
    %4 = vector.load %arg4[%c0_3, %c0_4] : memref<1x128xf32, #tpu.memory_space<vmem>>, vector<1x128xf32>
    %5 = vector.broadcast %4 : vector<1x128xf32> to vector<8x128xf32>
    %6 = arith.addf %3, %5 : vector<8x128xf32>
    %cst_5 = arith.constant 0.000000e+00 : f32
    %7 = vector.broadcast %cst_5 : f32 to vector<8x128xf32>
    %8 = arith.maximumf %6, %7 : vector<8x128xf32>
    %c0_6 = arith.constant 0 : index
    %c0_7 = arith.constant 0 : index
    %9 = vector.load %arg5[%c0_6, %c0_7] : memref<8x128xf32, #tpu.memory_space<vmem>>, vector<8x128xf32>
    %10 = arith.mulf %8, %9 : vector<8x128xf32>
    %c0_8 = arith.constant 0 : index
    %c0_9 = arith.constant 0 : index
    %11 = vector.load %arg6[%c0_8, %c0_9] : memref<8x128xf32, #tpu.memory_space<vmem>>, vector<8x128xf32>
    tpu.vector_store %arg6[%c0_8, %c0_9], %10 {strides = array<i32>} : memref<8x128xf32, #tpu.memory_space<vmem>>, vector<8x128xf32>,
    return
  }
  func.func @transform_0(%arg0: i32, %arg1: i32) -> (i32, i32) {
    %c0_i32 = arith.constant 0 : i32
    %c0_i32_0 = arith.constant 0 : i32
    return %arg0, %c0_i32 : i32, i32
  }
  func.func @transform_1(%arg0: i32, %arg1: i32) -> (i32, i32) {
    %c0_i32 = arith.constant 0 : i32
    %c0_i32_0 = arith.constant 0 : i32
    return %c0_i32, %arg1 : i32, i32
  }
  func.func @transform_2(%arg0: i32, %arg1: i32) -> (i32, i32) {
    %c0_i32 = arith.constant 0 : i32
    %c0_i32_0 = arith.constant 0 : i32
    return %c0_i32, %arg1 : i32, i32
  }
  func.func @transform_3(%arg0: i32, %arg1: i32) -> (i32, i32) {
    %c0_i32 = arith.constant 0 : i32
    return %arg0, %arg1 : i32, i32
  }
  func.func @transform_4(%arg0: i32, %arg1: i32) -> (i32, i32) {
    %c0_i32 = arith.constant 0 : i32
    return %arg0, %arg1 : i32, i32
  }
}

</mosaic_0001>

<llo_original>
// kernel: tpu_custom_call.1
$region0: #{tpu_custom_call.1}
  #allocation0 [shape = 'u32[]', space=smem, size = 0x4, offset = 0x4, fixed_abs, tag = 'smem constant byte address 0x4 - core index']
  #allocation1 [shape = 'u32[144,128]{1,0:T(1,128)}', space=vmem, size = 0x12000, scoped, tag = 'internal scratch']
  %s0 = inlined_call_operand.hbm [shape: f32[8,256], index: 0, kind: input, shape index: {}]
  %s1 = inlined_call_operand.hbm [shape: bf16[256,128], index: 1, kind: input, shape index: {}]
  %s2 = inlined_call_operand.vmem [shape: f32[1,128], index: 2, kind: input, shape index: {}]
  %s3 = inlined_call_operand.vmem [shape: f32[8,128], index: 3, kind: input, shape index: {}]
  %s4 = inlined_call_operand.hbm [shape: f32[8,128], index: 4, kind: output, shape index: {}]
  %s5 = sld [smem:[#allocation0]]
  $region34: #{tpu_custom_call.1} parent=0
    _
  %s7 = ssub.s32 1, %s5
  %s8 = scalar_select 0, %s7, %s5
  $region1: #{tpu_custom_call.1} parent=0
    #allocation2 [shape = 'u8[8192]{0}', space=vmem, size = 0x2000, scoped, tag = 'input window, operand 0, single buffered']
    #allocation3 [shape = 's32[1]{0}', space=sflag, size = 0x4, scoped, tag = 'scoped memory for tpu_custom_call.1']
    #allocation4 [shape = 's32[1]{0}', space=sflag, size = 0x4, scoped, tag = 'scoped memory for tpu_custom_call.1']
    #allocation5 [shape = 'u8[65536]{0}', space=vmem, size = 0x10000, scoped, tag = 'input window, operand 1, single buffered']
    #allocation6 [shape = 's32[1]{0}', space=sflag, size = 0x4, scoped, tag = 'scoped memory for tpu_custom_call.1']
    #allocation7 [shape = 'u8[4096]{0}', space=vmem, size = 0x1000, scoped, tag = 'output window, operand 0, single buffered']
    %9 = vsyncpa [#allocation3], 0
    %10 = vsyncpa [#allocation6], 0
    %11 = vsyncpa [#allocation4], 0
    // Predicated region
    $region2: #{tpu_custom_call.1} parent=1 // pred_check
      _
    $region3: #{tpu_custom_call.1} parent=1 // pred_check_branch
      %13 = sbr.rel (0) target = $region5
    $region4: #{tpu_custom_call.1} parent=1 // pred_region
      %s15 = ssub.s32 256, 256
      %16 = vsyncadd [#allocation3], %s15
      %s18 = sshll.u32 [#allocation2], 4
      %s19 = int_to_ptr.vmem [resolvable:$true] %s18
      %21 = dma.hbm_to_vmem [thread:$0]  %s0, 256, %s19, [#allocation3]
    $region5: #{tpu_custom_call.1} parent=1 // pred_fallthru
      _
    // Predicated region
    $region6: #{tpu_custom_call.1} parent=1 // pred_check
      _
    $region7: #{tpu_custom_call.1} parent=1 // pred_check_branch
      %23 = sbr.rel (0) target = $region9
    $region8: #{tpu_custom_call.1} parent=1 // pred_region
      %s25 = ssub.s32 2048, 2048
      %26 = vsyncadd [#allocation6], %s25
      %s27 = sshll.u32 [#allocation5], 4
      %s28 = int_to_ptr.vmem [resolvable:$true] %s27
      %33 = dma.hbm_to_vmem [thread:$0]  %s1, 2048, %s28, [#allocation6], 64, 64, 4
    $region9: #{tpu_custom_call.1} parent=1 // pred_fallthru
      _
    // Predicated region
    $region10: #{tpu_custom_call.1} parent=1 // pred_check
      _
    $region11: #{tpu_custom_call.1} parent=1 // pred_check_branch
      %35 = sbr.rel (0) target = $region13
    $region12: #{tpu_custom_call.1} parent=1 // pred_region
      _
    $region13: #{tpu_custom_call.1} parent=1 // pred_fallthru
      _
    // Predicated region
    $region14: #{tpu_custom_call.1} parent=1 // pred_check
      _
    $region15: #{tpu_custom_call.1} parent=1 // pred_check_branch
      %37 = sbr.rel (0) target = $region17
    $region16: #{tpu_custom_call.1} parent=1 // pred_region
      _
    $region17: #{tpu_custom_call.1} parent=1 // pred_fallthru
      _
    // Predicated region
    $region18: #{tpu_custom_call.1} parent=1 // pred_check
      _
    $region19: #{tpu_custom_call.1} parent=1 // pred_check_branch
      %39 = sbr.rel (0) target = $region21
    $region20: #{tpu_custom_call.1} parent=1 // pred_region
      %40 = dma.done [#allocation3], 256
    $region21: #{tpu_custom_call.1} parent=1 // pred_fallthru
      _
    // Predicated region
    $region22: #{tpu_custom_call.1} parent=1 // pred_check
      _
    $region23: #{tpu_custom_call.1} parent=1 // pred_check_branch
      %42 = sbr.rel (0) target = $region25
    $region24: #{tpu_custom_call.1} parent=1 // pred_region
      %43 = dma.done [#allocation6], 2048
    $region25: #{tpu_custom_call.1} parent=1 // pred_fallthru
      _
    %v45 = vld [vmem:[#allocation2] sm:$0xff]
    %v46 = vld [vmem:[#allocation2 + $0x8] sm:$0xff]
    %v47 = vpack.c.bf16 %v45, %v45
    %v48 = vpack.c.bf16 %v46, %v46
    %v49 = vld [vmem:[#allocation5] sm:$0xf]
    %v50 = vld [vmem:[#allocation5 + $0x4] sm:$0xf]
    %v51 = vld [vmem:[#allocation5 + $0x8] sm:$0xf]
    %v52 = vld [vmem:[#allocation5 + $0xc] sm:$0xf]
    %v53 = vld [vmem:[#allocation5 + $0x10] sm:$0xf]
    %v54 = vld [vmem:[#allocation5 + $0x14] sm:$0xf]
    %v55 = vld [vmem:[#allocation5 + $0x18] sm:$0xf]
    %v56 = vld [vmem:[#allocation5 + $0x1c] sm:$0xf]
    %v57 = vld [vmem:[#allocation5 + $0x20] sm:$0xf]
    %v58 = vld [vmem:[#allocation5 + $0x24] sm:$0xf]
    %v59 = vld [vmem:[#allocation5 + $0x28] sm:$0xf]
    %v60 = vld [vmem:[#allocation5 + $0x2c] sm:$0xf]
    %v61 = vld [vmem:[#allocation5 + $0x30] sm:$0xf]
    %v62 = vld [vmem:[#allocation5 + $0x34] sm:$0xf]
    %v63 = vld [vmem:[#allocation5 + $0x38] sm:$0xf]
    %v64 = vld [vmem:[#allocation5 + $0x3c] sm:$0xf]
    %v65 = vld [vmem:[#allocation5 + $0x40] sm:$0xf]
    %v66 = vld [vmem:[#allocation5 + $0x44] sm:$0xf]
    %v67 = vld [vmem:[#allocation5 + $0x48] sm:$0xf]
    %v68 = vld [vmem:[#allocation5 + $0x4c] sm:$0xf]
    %v69 = vld [vmem:[#allocation5 + $0x50] sm:$0xf]
    %v70 = vld [vmem:[#allocation5 + $0x54] sm:$0xf]
    %v71 = vld [vmem:[#allocation5 + $0x58] sm:$0xf]
    %v72 = vld [vmem:[#allocation5 + $0x5c] sm:$0xf]
    %v73 = vld [vmem:[#allocation5 + $0x60] sm:$0xf]
    %v74 = vld [vmem:[#allocation5 + $0x64] sm:$0xf]
    %v75 = vld [vmem:[#allocation5 + $0x68] sm:$0xf]
    %v76 = vld [vmem:[#allocation5 + $0x6c] sm:$0xf]
    %v77 = vld [vmem:[#allocation5 + $0x70] sm:$0xf]
    %v78 = vld [vmem:[#allocation5 + $0x74] sm:$0xf]
    %v79 = vld [vmem:[#allocation5 + $0x78] sm:$0xf]
    %v80 = vld [vmem:[#allocation5 + $0x7c] sm:$0xf]
    %v81 = vld [vmem:[%s2] sm:$0x1]
    %v83 = vlaneseq
    %v84 = vshrl.u32 %v83, 7
    %v85 = vsub.s32 0, %v84
    %v86 = vrot.slane %v81, %v85
    %v120 = vunpack.c.l.b16 %v49
    %v121 = vunpack.c.l.b16 %v50
    %v122 = vunpack.c.l.b16 %v51
    %v123 = vunpack.c.l.b16 %v52
    %v124 = vunpack.c.l.b16 %v53
    %v125 = vunpack.c.l.b16 %v54
    %v126 = vunpack.c.l.b16 %v55
    %v127 = vunpack.c.l.b16 %v56
    %v128 = vunpack.c.l.b16 %v57
    %v129 = vunpack.c.l.b16 %v58
    %v130 = vunpack.c.l.b16 %v59
    %v131 = vunpack.c.l.b16 %v60
    %v132 = vunpack.c.l.b16 %v61
    %v133 = vunpack.c.l.b16 %v62
    %v134 = vunpack.c.l.b16 %v63
    %v135 = vunpack.c.l.b16 %v64
    %v136 = vunpack.c.l.b16 %v65
    %v137 = vunpack.c.l.b16 %v66
    %v138 = vunpack.c.l.b16 %v67
    %v139 = vunpack.c.l.b16 %v68
    %v140 = vunpack.c.l.b16 %v69
    %v141 = vunpack.c.l.b16 %v70
    %v142 = vunpack.c.l.b16 %v71
    %v143 = vunpack.c.l.b16 %v72
    %v144 = vunpack.c.l.b16 %v73
    %v145 = vunpack.c.l.b16 %v74
    %v146 = vunpack.c.l.b16 %v75
    %v147 = vunpack.c.l.b16 %v76
    %v148 = vunpack.c.l.b16 %v77
    %v149 = vunpack.c.l.b16 %v78
    %v150 = vunpack.c.l.b16 %v79
    %v151 = vunpack.c.l.b16 %v80
    %v152 = vpack.c.b16 %v121, %v120
    %v153 = vpack.c.b16 %v123, %v122
    %v154 = vpack.c.b16 %v125, %v124
    %v155 = vpack.c.b16 %v127, %v126
    %v156 = vpack.c.b16 %v129, %v128
    %v157 = vpack.c.b16 %v131, %v130
    %v158 = vpack.c.b16 %v133, %v132
    %v159 = vpack.c.b16 %v135, %v134
    %v160 = vpack.c.b16 %v137, %v136
    %v161 = vpack.c.b16 %v139, %v138
    %v162 = vpack.c.b16 %v141, %v140
    %v163 = vpack.c.b16 %v143, %v142
    %v164 = vpack.c.b16 %v145, %v144
    %v165 = vpack.c.b16 %v147, %v146
    %v166 = vpack.c.b16 %v149, %v148
    %v167 = vpack.c.b16 %v151, %v150
    %184 = vmatprep.subr.bf16.mxu0 0
    %185 = vmatpush1.bf16.msra.mxu0 %v152
    %186 = vmatprep.subr.bf16.mxu0 0
    %187 = vmatpush1.bf16.msra.mxu0 %v153
    %188 = vmatprep.subr.bf16.mxu0 0
    %189 = vmatpush1.bf16.msra.mxu0 %v154
    %190 = vmatprep.subr.bf16.mxu0 0
    %191 = vmatpush1.bf16.msra.mxu0 %v155
    %192 = vmatprep.subr.bf16.mxu0 0
    %193 = vmatpush1.bf16.msra.mxu0 %v156
    %194 = vmatprep.subr.bf16.mxu0 0
    %195 = vmatpush1.bf16.msra.mxu0 %v157
    %196 = vmatprep.subr.bf16.mxu0 0
    %197 = vmatpush1.bf16.msra.mxu0 %v158
    %198 = vmatprep.subr.bf16.mxu0 0
    %199 = vmatpush1.bf16.msra.mxu0 %v159
    %200 = vmatprep.subr.bf16.mxu0 0
    %201 = vmatpush1.bf16.msra.mxu0 %v160
    %202 = vmatprep.subr.bf16.mxu0 0
    %203 = vmatpush1.bf16.msra.mxu0 %v161
    %204 = vmatprep.subr.bf16.mxu0 0
    %205 = vmatpush1.bf16.msra.mxu0 %v162
    %206 = vmatprep.subr.bf16.mxu0 0
    %207 = vmatpush1.bf16.msra.mxu0 %v163
    %208 = vmatprep.subr.bf16.mxu0 0
    %209 = vmatpush1.bf16.msra.mxu0 %v164
    %210 = vmatprep.subr.bf16.mxu0 0
    %211 = vmatpush1.bf16.msra.mxu0 %v165
    %212 = vmatprep.subr.bf16.mxu0 0
    %213 = vmatpush1.bf16.msra.mxu0 %v166
    %214 = vmatprep.subr.bf16.mxu0 0
    %215 = vmatpush1.bf16.msra.mxu0 %v167
    %216 = vmatprep.mubr.bf16.mxu0 %v48
    %217 = vmatmul.mubr.bf16.gmra.mrb[0].mxu0 %v47
    %v218 = vpop.f32.mrb[0].mxu0
    %v219 = vadd.f32 %v86, %v218
    %v220 = vpop.f32.mrb[0].mxu0
    %v221 = vpop.f32.mrb[0].mxu0
    %v222 = vpop.f32.mrb[0].mxu0
    %223 = vdwg.mxu0
    %v224 = vmax.f32 %v219, 0.0
    %v225 = vld [vmem:[%s3] sm:$0xff]
    %v226 = vmul.f32 %v224, %v225
    %227 = vst [vmem:[#allocation7] sm:$0xff] %v226
    // Predicated region
    $region26: #{tpu_custom_call.1} parent=1 // pred_check
      _
    $region27: #{tpu_custom_call.1} parent=1 // pred_check_branch
      %229 = sbr.rel (0) target = $region29
    $region28: #{tpu_custom_call.1} parent=1 // pred_region
      %s231 = ssub.s32 128, 128
      %232 = vsyncadd [#allocation4], %s231
      %s234 = sshll.u32 [#allocation7], 4
      %s235 = int_to_ptr.vmem [resolvable:$true] %s234
      %237 = dma.vmem_to_hbm [thread:$0]  %s235, 128, %s4, [#allocation4]
    $region29: #{tpu_custom_call.1} parent=1 // pred_fallthru
      _
    // Predicated region
    $region30: #{tpu_custom_call.1} parent=1 // pred_check
      _
    $region31: #{tpu_custom_call.1} parent=1 // pred_check_branch
      %239 = sbr.rel (0) target = $region33
    $region32: #{tpu_custom_call.1} parent=1 // pred_region
      %240 = dma.done [#allocation4], 128
    $region33: #{tpu_custom_call.1} parent=1 // pred_fallthru
      _
    %241 = vsyncpa [#allocation3], 1
    %242 = vsyncpa [#allocation6], 1
    %243 = vsyncpa [#allocation4], 1

</llo_original>
